<compile_context>
chip_gen: v6e
topology: v6e:2x2x1
jax: 0.10.0
libtpu: 0.0.40
codegen_flags: <defaults>
</compile_context>

<pallas_src>
import numpy as np
import jax
import jax.numpy as jnp
from jax.experimental import pallas as pl
from jax.experimental.pallas import tpu as pltpu


# ---------------------------------------------------------------------------
# Diffusion schedule (glue, plain numpy, computed once at import) --
# get_named_beta_schedule('linear', 1000).  Stored as f32 host constants.
# ---------------------------------------------------------------------------
def _linear_beta_schedule_f32(num_timesteps: int = 1000):
    scale = 1000.0 / num_timesteps
    beta_start = scale * 0.0001
    beta_end = scale * 0.02
    betas = np.linspace(beta_start, beta_end, num_timesteps, dtype=np.float64)
    alphas_cumprod = np.cumprod(1.0 - betas, axis=0)
    sqrt_ac = np.sqrt(alphas_cumprod).astype(np.float32)
    sqrt_1mac = np.sqrt(1.0 - alphas_cumprod).astype(np.float32)
    return sqrt_ac, sqrt_1mac


SQRT_AC_F32, SQRT_1MAC_F32 = _linear_beta_schedule_f32(1000)


def _pick_lanes(chw: int) -> int:
    """Largest lane width in {2048..128} that divides CHW; else full extent."""
    if chw % 128 == 0:
        for cand in (2048, 1024, 512, 256, 128):
            if chw % cand == 0:
                return cand
    return chw  # full-extent lane dim (allowed when equal to the array dim)


def _pick_row_tile(rows: int, target: int = 256) -> int:
    """Largest divisor of `rows` that is a multiple of 8 and <= target; else rows."""
    if rows <= target:
        return rows
    d = target - (target % 8)
    while d >= 8:
        if rows % d == 0:
            return d
        d -= 8
    # TODO(synk): pathological (prime) row counts fall back to one full block.
    return rows


def _tensorcores_per_device() -> int:
    """2 on megacore-style devices (v4/v5p, v7x); 1 on v5e/v6e."""
    try:
        kind = jax.devices()[0].device_kind.lower()
    except Exception:
        return 1
    if any(tag in kind for tag in ("v4", "v5p", "v7")):
        return 2
    return 1


# ---------------------------------------------------------------------------
# Kernel 1: q_sample
#   grid = (N, row_tiles); per-batch tile is (row_tile, L) lane/sublane-dense.
#   t, sqrt_ac, sqrt_1mac are scalar-prefetched into SMEM; the per-batch
#   scalars a = sqrt_ac[t[n]], b = sqrt_1mac[t[n]] are read inside the kernel.
# ---------------------------------------------------------------------------
def _q_sample_kernel(t_ref, sac_ref, s1m_ref, x_ref, noise_ref, o_ref):
    n = pl.program_id(0)
    tn = t_ref[n]                 # SMEM scalar read
    a = sac_ref[tn]               # sqrt(alphas_cumprod[t])
    b = s1m_ref[tn]               # sqrt(1 - alphas_cumprod[t])
    o_ref[...] = (a * x_ref[...] + b * noise_ref[...]).astype(o_ref.dtype)


def q_sample(x, t, noise, sqrt_ac=SQRT_AC_F32, sqrt_1mac=SQRT_1MAC_F32):
    N, C, H, W = x.shape
    chw = C * H * W
    L = _pick_lanes(chw)
    rows = chw // L
    rt = _pick_row_tile(rows)

    x_r = x.reshape(N, rows, L)
    noise_r = noise.reshape(N, rows, L)

    spec = pl.BlockSpec((None, rt, L),
                        lambda n, r, t_ref, sac_ref, s1m_ref: (n, r, 0))

    out_r = pl.pallas_call(
        _q_sample_kernel,
        out_shape=jax.ShapeDtypeStruct((N, rows, L), x.dtype),
        grid_spec=pltpu.PrefetchScalarGridSpec(
            num_scalar_prefetch=3,
            grid=(N, rows // rt),
            in_specs=[spec, spec],
            out_specs=spec,
        ),
        compiler_params=pltpu.CompilerParams(
            dimension_semantics=("parallel", "parallel")),
    )(t.astype(jnp.int32), jnp.asarray(sqrt_ac), jnp.asarray(sqrt_1mac),
      x_r, noise_r)
    return out_r.reshape(N, C, H, W)


# ---------------------------------------------------------------------------
# Kernel 2: ddim_sample uncertainty aggregation (compute_uncer fused)
#   inputs (collapsed batch=1, channel=1 of (1,1,H,W)):
#     model_outs: (T=10, U=2, H, W)   per-step 'all_model_outputs'
#     samples   : (T=10, U=2, H, W)   per-step 'all_samples'
#     coef      : (2, T) SMEM table: c0[k]=0.5*exp(sigmoid((k+1)/10)),
#                                    c1[k]=-sigmoid((k+1)/10)
#   grid = (n_sp, T // t_blk):
#     n_sp spatial row-tiles ("parallel"; 2 only on 2-TC devices, else 1),
#     T blocked by t_blk with a statically unrolled inner loop ("arbitrary",
#     kept LAST so the resident-output accumulator pattern stays valid).
# ---------------------------------------------------------------------------
def _uncer_agg_kernel(coef_ref, outs_ref, samps_ref, o_ref):
    kb = pl.program_id(1)           # reduction (T-block) axis -- last grid axis
    t_blk = outs_ref.shape[0]

    @pl.when(kb == 0)
    def _():
        o_ref[...] = jnp.zeros_like(o_ref)

    acc = jnp.zeros(o_ref.shape[2:], jnp.float32)
    for j in range(t_blk):          # static unroll over the T block
        k = kb * t_blk + j          # global step index for the coef table
        # uncer_out = (out_0 + out_1) / uncer_step
        u = (outs_ref[j, 0] + outs_ref[j, 1]) * 0.5
        # compute_uncer: p = clamp(sigmoid(u), 0.001); uncer = -p*log(p)
        p = jnp.maximum(jax.nn.sigmoid(u), jnp.float32(0.001))
        uncer = -p * jnp.log(p)
        # 0.5*exp(sig*(1-uncer)) == c0[k] * exp(c1[k] * uncer)
        w = coef_ref[0, k] * jnp.exp(coef_ref[1, k] * uncer)
        acc = acc + w * (samps_ref[j, 0] + samps_ref[j, 1])
    o_ref[0, 0] += acc


def ddim_uncertainty_aggregate(model_outs, samples):
    T, U, H, W = model_outs.shape
    assert U == 2

    # Host-baked per-step coefficients (fold the trailing "/ uncer_step" in).
    s = np.arange(1, T + 1, dtype=np.float64) / 10.0
    sig = 1.0 / (1.0 + np.exp(-s))
    c0 = (0.5 * np.exp(sig)).astype(np.float32)
    c1 = (-sig).astype(np.float32)
    coef = np.stack([c0, c1], axis=0)           # (2, T) -> SMEM

    # Block the reduction (T) axis.
    if T % 5 == 0:
        t_blk = 5
    elif T % 2 == 0:
        t_blk = 2
    else:
        t_blk = 1

    # Spatial split only where there are 2 TensorCores and tiles stay aligned.
    n_sp = _tensorcores_per_device()
    if n_sp > 1 and not (H % (8 * n_sp) == 0 and W % 128 == 0):
        n_sp = 1
    h_tile = H // n_sp

    return pl.pallas_call(
        _uncer_agg_kernel,
        out_shape=jax.ShapeDtypeStruct((1, 1, H, W), jnp.float32),
        grid=(n_sp, T // t_blk),
        in_specs=[
            pl.BlockSpec(memory_space=pltpu.MemorySpace.SMEM),              # coef (2,T)
            pl.BlockSpec((t_blk, U, h_tile, W), lambda sp, kb: (kb, 0, sp, 0)),
            pl.BlockSpec((t_blk, U, h_tile, W), lambda sp, kb: (kb, 0, sp, 0)),
        ],
        out_specs=pl.BlockSpec((1, 1, h_tile, W), lambda sp, kb: (0, 0, sp, 0)),
        compiler_params=pltpu.CompilerParams(
            dimension_semantics=("parallel", "arbitrary")),
    )(jnp.asarray(coef), model_outs, samples)


# ---------------------------------------------------------------------------
# Pure-JAX references for correctness checks
# ---------------------------------------------------------------------------
def q_sample_ref(x, t, noise, sqrt_ac=SQRT_AC_F32, sqrt_1mac=SQRT_1MAC_F32):
    a = jnp.asarray(sqrt_ac)[t].astype(jnp.float32)[:, None, None, None]
    b = jnp.asarray(sqrt_1mac)[t].astype(jnp.float32)[:, None, None, None]
    return a * x + b * noise


def ddim_uncertainty_aggregate_ref(model_outs, samples):
    T, U, H, W = model_outs.shape
    ret = jnp.zeros((1, 1, H, W), jnp.float32)
    for idx in range(T):
        u = (model_outs[idx, 0] + model_outs[idx, 1]) / U
        p = jnp.maximum(jax.nn.sigmoid(u), 0.001)
        uncer = -p * jnp.log(p)
        w = jnp.exp(jax.nn.sigmoid(jnp.float32((idx + 1) / 10.0)) * (1.0 - uncer))
        for i in range(U):
            ret = ret + w * samples[idx, i]
    return ret / U


# ---------------------------------------------------------------------------
if __name__ == "__main__":
    key = jax.random.PRNGKey(0)
    k_x, k_noise, k_t, k_mo, k_sm = jax.random.split(key, 5)

    # ---- q_sample path (small shapes: batch=2, channel=1, spatial=16) ----
    x = jax.random.normal(k_x, (2, 1, 16, 16), dtype=jnp.float32)
    noise = jax.random.normal(k_noise, (2, 1, 16, 16), dtype=jnp.float32)
    t = jax.random.randint(k_t, (2,), 0, 1000)   # UniformSampler.sample -> t, weight=1

    out_q = jax.block_until_ready(q_sample(x, t, noise))
    ref_q = q_sample_ref(x, t, noise)
    np.testing.assert_allclose(np.asarray(out_q), np.asarray(ref_q),
                               rtol=1e-5, atol=1e-5)

    # ---- ddim_sample aggregation (module hardcodes (1,1,256,256), 10 steps, 2 runs) ----
    T, U, H, W = 10, 2, 256, 256
    model_outs = jax.random.normal(k_mo, (T, U, H, W), dtype=jnp.float32)  # stand-in UNet outs
    samples = jax.random.normal(k_sm, (T, U, H, W), dtype=jnp.float32)     # stand-in DDIM samples

    out_a = jax.block_until_ready(ddim_uncertainty_aggregate(model_outs, samples))
    ref_a = ddim_uncertainty_aggregate_ref(model_outs, samples)
    np.testing.assert_allclose(np.asarray(out_a), np.asarray(ref_a),
                               rtol=1e-5, atol=1e-4)

    print("KERNEL_OK")
</pallas_src>

<mosaic_0001>
module attributes {stable_mosaic.version = 11 : i64} {
  func.func @_q_sample_kernel(%arg0: i32, %arg1: i32, %arg2: memref<2xi32, #tpu.memory_space<smem>>, %arg3: memref<1000xf32, #tpu.memory_space<smem>>, %arg4: memref<1000xf32, #tpu.memory_space<smem>>, %arg5: memref<1x1x256xf32, #tpu.memory_space<vmem>>, %arg6: memref<1x1x256xf32, #tpu.memory_space<vmem>>, %arg7: memref<1x1x256xf32, #tpu.memory_space<vmem>>) attributes {dimension_semantics = [#tpu.dimension_semantics<parallel>, #tpu.dimension_semantics<parallel>], iteration_bounds = array<i64: 2, 1>, scalar_prefetch = 3 : i64, scratch_operands = 0 : i64, tpu.core_type = #tpu.core_type<tc>, window_params = [{transform_indices = @transform_0, window_bounds = array<i64: 1, 1, 256>}, {transform_indices = @transform_1, window_bounds = array<i64: 1, 1, 256>}, {transform_indices = @transform_2, window_bounds = array<i64: 1, 1, 256>}]} {
    %0 = arith.index_cast %arg0 : i32 to index
    %1 = memref.load %arg2[%0] : memref<2xi32, #tpu.memory_space<smem>>
    %2 = arith.index_cast %1 : i32 to index
    %3 = memref.load %arg3[%2] : memref<1000xf32, #tpu.memory_space<smem>>
    %4 = arith.index_cast %1 : i32 to index
    %5 = memref.load %arg4[%4] : memref<1000xf32, #tpu.memory_space<smem>>
    %c0 = arith.constant 0 : index
    %c0_0 = arith.constant 0 : index
    %c0_1 = arith.constant 0 : index
    %6 = vector.load %arg5[%c0, %c0_0, %c0_1] : memref<1x1x256xf32, #tpu.memory_space<vmem>>, vector<1x1x256xf32>
    %7 = vector.shape_cast %6 : vector<1x1x256xf32> to vector<1x256xf32>
    %8 = vector.broadcast %3 : f32 to vector<1x256xf32>
    %9 = arith.mulf %8, %7 : vector<1x256xf32>
    %c0_2 = arith.constant 0 : index
    %c0_3 = arith.constant 0 : index
    %c0_4 = arith.constant 0 : index
    %10 = vector.load %arg6[%c0_2, %c0_3, %c0_4] : memref<1x1x256xf32, #tpu.memory_space<vmem>>, vector<1x1x256xf32>
    %11 = vector.shape_cast %10 : vector<1x1x256xf32> to vector<1x256xf32>
    %12 = vector.broadcast %5 : f32 to vector<1x256xf32>
    %13 = arith.mulf %12, %11 : vector<1x256xf32>
    %14 = arith.addf %9, %13 : vector<1x256xf32>
    %c0_5 = arith.constant 0 : index
    %c0_6 = arith.constant 0 : index
    %c0_7 = arith.constant 0 : index
    %15 = vector.load %arg7[%c0_5, %c0_6, %c0_7] : memref<1x1x256xf32, #tpu.memory_space<vmem>>, vector<1x1x256xf32>
    %16 = vector.shape_cast %15 : vector<1x1x256xf32> to vector<1x256xf32>
    %17 = vector.shape_cast %14 : vector<1x256xf32> to vector<1x1x256xf32>
    tpu.vector_store %arg7[%c0_5, %c0_6, %c0_7], %17 {strides = array<i32>} : memref<1x1x256xf32, #tpu.memory_space<vmem>>, vector<1x1x256xf32>,
    return
  }
  func.func @transform_0(%arg0: i32, %arg1: i32, %arg2: memref<2xi32, #tpu.memory_space<smem>>, %arg3: memref<1000xf32, #tpu.memory_space<smem>>, %arg4: memref<1000xf32, #tpu.memory_space<smem>>) -> (i32, i32, i32) {
    %c0_i32 = arith.constant 0 : i32
    %c0_i32_0 = arith.constant 0 : i32
    return %arg0, %arg1, %c0_i32 : i32, i32, i32
  }
  func.func @transform_1(%arg0: i32, %arg1: i32, %arg2: memref<2xi32, #tpu.memory_space<smem>>, %arg3: memref<1000xf32, #tpu.memory_space<smem>>, %arg4: memref<1000xf32, #tpu.memory_space<smem>>) -> (i32, i32, i32) {
    %c0_i32 = arith.constant 0 : i32
    %c0_i32_0 = arith.constant 0 : i32
    return %arg0, %arg1, %c0_i32 : i32, i32, i32
  }
  func.func @transform_2(%arg0: i32, %arg1: i32, %arg2: memref<2xi32, #tpu.memory_space<smem>>, %arg3: memref<1000xf32, #tpu.memory_space<smem>>, %arg4: memref<1000xf32, #tpu.memory_space<smem>>) -> (i32, i32, i32) {
    %c0_i32 = arith.constant 0 : i32
    %c0_i32_0 = arith.constant 0 : i32
    return %arg0, %arg1, %c0_i32 : i32, i32, i32
  }
}

</mosaic_0001>

<llo_original>
// kernel: tpu_custom_call.1
$region0: #{tpu_custom_call.1}
  #allocation0 [shape = 'u32[]', space=smem, size = 0x4, offset = 0x4, fixed_abs, tag = 'smem constant byte address 0x4 - core index']
  #allocation1 [shape = 'u32[144,128]{1,0:T(1,128)}', space=vmem, size = 0x12000, scoped, tag = 'internal scratch']
  #allocation2 [shape = 's32[1]{0}', space=sflag, size = 0x4, scoped, tag = 'scoped memory for tpu_custom_call.1']
  #allocation3 [shape = 'u8[512]{0}', space=smem, size = 0x200, scoped, tag = 'prefetched SMEM operand 0']
  #allocation4 [shape = 'u8[4096]{0}', space=smem, size = 0x1000, scoped, tag = 'prefetched SMEM operand 1']
  #allocation5 [shape = 'u8[4096]{0}', space=smem, size = 0x1000, scoped, tag = 'prefetched SMEM operand 2']
  %s0 = inlined_call_operand.hbm [shape: s32[2], index: 0, kind: input, shape index: {}]
  %s1 = inlined_call_operand.hbm [shape: f32[1000], index: 1, kind: input, shape index: {}]
  %s2 = inlined_call_operand.hbm [shape: f32[1000], index: 2, kind: input, shape index: {}]
  %s3 = inlined_call_operand.vmem [shape: f32[2,1,256], index: 3, kind: input, shape index: {}]
  %s4 = inlined_call_operand.hbm [shape: f32[2,1,256], index: 4, kind: input, shape index: {}]
  %s5 = inlined_call_operand.hbm [shape: f32[2,1,256], index: 5, kind: output, shape index: {}]
  %s6 = sld [smem:[#allocation0]]
  $region45: #{tpu_custom_call.1} parent=0
    _
  %s8 = ssub.s32 1, %s6
  %s9 = scalar_select 0, %s8, %s6
  %11 = dma.hbm_to_smem %s0, 16, [#allocation3], [#allocation2]
  %13 = dma.hbm_to_smem %s1, 128, [#allocation4], [#allocation2]
  %15 = dma.hbm_to_smem %s2, 128, [#allocation5], [#allocation2]
  %16 = dma.done [#allocation2], 272
  %17 = sfence
  $region1: #{tpu_custom_call.1} parent=0
    #allocation6 [shape = 'u8[2048]{0}', space=vmem, size = 0x800, scoped, tag = 'input window, operand 4']
    #allocation7 [shape = 's32[2]{0}', space=sflag, size = 0x8, scoped, tag = 'scoped memory for tpu_custom_call.1']
    #allocation8 [shape = 's32[2]{0}', space=sflag, size = 0x8, scoped, tag = 'scoped memory for tpu_custom_call.1']
    #allocation9 [shape = 'u8[2048]{0}', space=vmem, size = 0x800, scoped, tag = 'output window, operand 0']
    %18 = vsyncpa [#allocation7], 0
    %s19 = scalar_lea.sflag [#allocation7], 1
    %20 = vsyncpa %s19, 0
    %21 = vsyncpa [#allocation8], 0
    %s22 = scalar_lea.sflag [#allocation8], 1
    %23 = vsyncpa %s22, 0
    loop: start=0, step=1, limit=4
    $region2: #{tpu_custom_call.1} parent=1 // loop_pre_header
      _
    $region3: #{tpu_custom_call.1} parent=1 // loop_header
      %s25 = sphi 0, %s29
      %p26 = scmp.ge.s32.totalorder %s25, 4
      %s32 = sphi 0, %s44
      %s33 = sphi 0, %s40
      %s34 = sphi 0, %s32
      %s35 = sphi 0, %s33
      %s36 = sphi 0, %s34
      %s37 = sphi 0, %s35
      %s49 = sphi 0, %s51
      %s52 = sphi 0, %s49
      %s53 = sphi 0, %s52
      %s69 = sphi 0, %s53
      %s77 = sphi 0, %s79
      %s80 = sphi 0, %s77
      %s81 = sphi 0, %s80
      %s97 = sphi 0, %s81
      %s105 = sphi 0, %s107
      %s108 = sphi 0, %s105
      %s109 = sphi 0, %s108
      %s125 = sphi 0, %s109
    $region4: #{tpu_custom_call.1} parent=1 // loop_header_branch
      %28 = sbr.rel (%p26) target = $region8
    $region5: #{tpu_custom_call.1} parent=1 // loop_body
      %s30 = ssub.s32 %s25, 1
      %s31 = ssub.s32 %s25, 2
      %s38 = sadd.s32 1, %s33
      %p39 = scmp.ge.s32.totalorder %s38, 1
      %s40 = scalar_select %p39, 0, %s38
      %s41 = sadd.s32 1, %s32
      %s42 = scalar_select %p39, %s41, %s32
      %p43 = scmp.ge.s32.totalorder %s42, 2
      %s44 = scalar_select %p43, 0, %s42
      %s45 = ssub.s32 %s32, %s44
      %s46 = ssub.s32 %s33, %s40
      %s47 = sor.u32 %s45, %s46
      %p48 = scmp.eq.s32.totalorder %s47, 0
      %s50 = sadd.s32 %s49, 1
      %s51 = scalar_select %p48, %s49, %s50
      %p54 = pneg %p48
      %p55 = scmp.eq.s32.totalorder %s25, 1
      %p56 = por %p54, %p55
      %p57 = scmp.ne.s32.totalorder %s49, %s52
      %p58 = scmp.eq.s32.totalorder %s25, 0
      %p59 = por %p57, %p58
      %p60 = scmp.ne.s32.totalorder %s49, %s52
      %p61 = scmp.eq.s32.totalorder %s30, 1
      %p62 = por %p60, %p61
      %p63 = scmp.ne.s32.totalorder %s52, %s53
      %p64 = scmp.eq.s32.totalorder %s30, 0
      %p65 = por %p63, %p64
      %p66 = scmp.ne.s32.totalorder %s52, %s53
      %p67 = scmp.eq.s32.totalorder %s31, 1
      %p68 = por %p66, %p67
      %p70 = scmp.ne.s32.totalorder %s53, %s69
      %p71 = scmp.eq.s32.totalorder %s31, 0
      %p72 = por %p70, %p71
      %s73 = ssub.s32 %s32, %s44
      %s74 = ssub.s32 %s33, %s40
      %s75 = sor.u32 %s73, %s74
      %p76 = scmp.eq.s32.totalorder %s75, 0
      %s78 = sadd.s32 %s77, 1
      %s79 = scalar_select %p76, %s77, %s78
      %p82 = pneg %p76
      %p83 = scmp.eq.s32.totalorder %s25, 1
      %p84 = por %p82, %p83
      %p85 = scmp.ne.s32.totalorder %s77, %s80
      %p86 = scmp.eq.s32.totalorder %s25, 0
      %p87 = por %p85, %p86
      %p88 = scmp.ne.s32.totalorder %s77, %s80
      %p89 = scmp.eq.s32.totalorder %s30, 1
      %p90 = por %p88, %p89
      %p91 = scmp.ne.s32.totalorder %s80, %s81
      %p92 = scmp.eq.s32.totalorder %s30, 0
      %p93 = por %p91, %p92
      %p94 = scmp.ne.s32.totalorder %s80, %s81
      %p95 = scmp.eq.s32.totalorder %s31, 1
      %p96 = por %p94, %p95
      %p98 = scmp.ne.s32.totalorder %s81, %s97
      %p99 = scmp.eq.s32.totalorder %s31, 0
      %p100 = por %p98, %p99
      %s101 = ssub.s32 %s32, %s44
      %s102 = ssub.s32 %s33, %s40
      %s103 = sor.u32 %s101, %s102
      %p104 = scmp.eq.s32.totalorder %s103, 0
      %s106 = sadd.s32 %s105, 1
      %s107 = scalar_select %p104, %s105, %s106
      %p110 = pneg %p104
      %p111 = scmp.eq.s32.totalorder %s25, 1
      %p112 = por %p110, %p111
      %p113 = scmp.ne.s32.totalorder %s105, %s108
      %p114 = scmp.eq.s32.totalorder %s25, 0
      %p115 = por %p113, %p114
      %p116 = scmp.ne.s32.totalorder %s105, %s108
      %p117 = scmp.eq.s32.totalorder %s30, 1
      %p118 = por %p116, %p117
      %p119 = scmp.ne.s32.totalorder %s108, %s109
      %p120 = scmp.eq.s32.totalorder %s30, 0
      %p121 = por %p119, %p120
      %p122 = scmp.ne.s32.totalorder %s108, %s109
      %p123 = scmp.eq.s32.totalorder %s31, 1
      %p124 = por %p122, %p123
      %p126 = scmp.ne.s32.totalorder %s109, %s125
      %p127 = scmp.eq.s32.totalorder %s31, 0
      %p128 = por %p126, %p127
      %p129 = scmp.le.s32.totalorder 1, %s25
      %p130 = scmp.lt.s32.totalorder %s25, 3
      %p131 = pnand %p129, %p130
      %p132 = pneg %p131
      // Predicated region
      $region9: #{tpu_custom_call.1} parent=5 // pred_check
        _
      $region10: #{tpu_custom_call.1} parent=5 // pred_check_branch
        %134 = sbr.rel (%p131) target = $region12
      $region11: #{tpu_custom_call.1} parent=5 // pred_region
        %s135 = ssub.s32 %s25, 1
      $region12: #{tpu_custom_call.1} parent=5 // pred_fallthru
        _
      %p136 = scmp.lt.s32.totalorder %s25, 2
      // Predicated region
      $region13: #{tpu_custom_call.1} parent=5 // pred_check
        %p137 = pneg %p136
      $region14: #{tpu_custom_call.1} parent=5 // pred_check_branch
        %139 = sbr.rel (%p137) target = $region16
      $region15: #{tpu_custom_call.1} parent=5 // pred_region
        // Predicated region
        $region17: #{tpu_custom_call.1} parent=15 // pred_check
          %p140 = pneg %p59
        $region18: #{tpu_custom_call.1} parent=15 // pred_check_branch
          %142 = sbr.rel (%p140) target = $region20
        $region19: #{tpu_custom_call.1} parent=15 // pred_region
          %p143 = scmp.lt.s32.totalorder %s32, 1
          %s144 = scalar_select %p143, %s32, 1
          %p145 = scmp.lt.s32.totalorder %s33, 0
          %s146 = scalar_select %p145, %s33, 0
          %s147 = smul.addr %s146, 2
          %s148 = smul.addr %s144, 2
          %s149 = sadd.s32 %s147, %s148
          %s150 = scalar_lea.vmem %s3, %s149
        $region20: #{tpu_custom_call.1} parent=15 // pred_fallthru
          _
        // Predicated region
        $region21: #{tpu_custom_call.1} parent=15 // pred_check
          %p151 = pneg %p87
        $region22: #{tpu_custom_call.1} parent=15 // pred_check_branch
          %153 = sbr.rel (%p151) target = $region24
        $region23: #{tpu_custom_call.1} parent=15 // pred_region
          %s154 = sand.u32 %s77, 1
          %s155 = scalar_lea.sflag [#allocation7], %s154
          %s156 = sand.u32 %s77, 1
          %s157 = smul.addr %s156, 2
          %s158 = scalar_lea.vmem [#allocation6], %s157
          %s160 = ssub.s32 32, 32
          %161 = vsyncadd %s155, %s160
          %s162 = smul.addr %s33, 2
          %s163 = smul.addr %s32, 2
          %s164 = sadd.s32 %s162, %s163
          %s165 = smul.addr %s164, 16
          %s166 = scalar_lea.hbm %s4, %s165
          %s168 = sshll.u32 %s158, 4
          %s169 = int_to_ptr.vmem [resolvable:$true] %s168
          %171 = dma.hbm_to_vmem [thread:$0]  %s166, 32, %s169, %s155
        $region24: #{tpu_custom_call.1} parent=15 // pred_fallthru
          _
      $region16: #{tpu_custom_call.1} parent=5 // pred_fallthru
        _
      %p172 = scmp.le.s32.totalorder 1, %s25
      %p173 = scmp.lt.s32.totalorder %s25, 3
      %p174 = pnand %p172, %p173
      %p175 = pneg %p174
      // Predicated region
      $region25: #{tpu_custom_call.1} parent=5 // pred_check
        _
      $region26: #{tpu_custom_call.1} parent=5 // pred_check_branch
        %177 = sbr.rel (%p174) target = $region28
      $region27: #{tpu_custom_call.1} parent=5 // pred_region
        %s178 = ssub.s32 %s25, 1
        %s179 = sand.u32 %s80, 1
        %s180 = scalar_lea.sflag [#allocation7], %s179
        %s181 = sand.u32 %s80, 1
        %s182 = smul.addr %s181, 2
        %s183 = scalar_lea.vmem [#allocation6], %s182
        // Predicated region
        $region29: #{tpu_custom_call.1} parent=27 // pred_check
          %p184 = pneg %p93
        $region30: #{tpu_custom_call.1} parent=27 // pred_check_branch
          %186 = sbr.rel (%p184) target = $region32
        $region31: #{tpu_custom_call.1} parent=27 // pred_region
          %187 = dma.done %s180, 32
        $region32: #{tpu_custom_call.1} parent=27 // pred_fallthru
          _
        %p188 = scmp.lt.s32.totalorder %s34, 1
        %s189 = scalar_select %p188, %s34, 1
        %p190 = scmp.lt.s32.totalorder %s35, 0
        %s191 = scalar_select %p190, %s35, 0
        %s192 = smul.addr %s191, 2
        %s193 = smul.addr %s189, 2
        %s194 = sadd.s32 %s192, %s193
        %s195 = scalar_lea.vmem %s3, %s194
        %p196 = pneg %p65
        %p197 = pneg %p62
        %s198 = sand.u32 %s80, 1
        %s199 = scalar_lea.sflag [#allocation7], %s198
        %s200 = sand.u32 %s80, 1
        %s201 = smul.addr %s200, 2
        %s202 = scalar_lea.vmem [#allocation6], %s201
        %p203 = pneg %p93
        %p204 = pneg %p90
        %p205 = pneg %p121
        %p206 = pneg %p118
        %s207 = sand.u32 %s108, 1
        %s208 = scalar_lea.sflag [#allocation8], %s207
        %s209 = sand.u32 %s108, 1
        %s210 = smul.addr %s209, 2
        %s211 = scalar_lea.vmem [#allocation9], %s210
        %p212 = scmp.lt.s32.totalorder %s34, 1
        %s213 = scalar_select %p212, %s34, 1
        %p214 = scmp.lt.s32.totalorder %s35, 0
        %s215 = scalar_select %p214, %s35, 0
        %s216 = smul.addr %s215, 2
        %s217 = smul.addr %s213, 2
        %s218 = sadd.s32 %s216, %s217
        %s219 = scalar_lea.vmem %s3, %s218
        %s220 = sld [smem:[#allocation3 + %s34]]
        %s221 = sld [smem:[#allocation4 + %s220]]
        %s222 = sld [smem:[#allocation5 + %s220]]
        %v223 = vld [vmem:[%s219] sm:$0x3]
        %v224 = vstv %s221
        %v225 = vmul.f32 %v224, %v223
        %v226 = vld [vmem:[%s183] sm:$0x3]
        %v227 = vstv %s222
        %v228 = vmul.f32 %v227, %v226
        %v229 = vadd.f32 %v225, %v228
        %v230 = vlaneseq
        %vm231 = vcmp.ge.s32.totalorder %v230, 0
        %vm232 = vcmp.lt.s32.totalorder %v230, 256
        %vm233 = vmand %vm231, %vm232
        %234 = vst.msk [vmem:[%s211] sm:$0x3] %vm233, %v229
        %s235 = sand.u32 %s108, 1
        %s236 = scalar_lea.sflag [#allocation8], %s235
        %s237 = sand.u32 %s108, 1
        %s238 = smul.addr %s237, 2
        %s239 = scalar_lea.vmem [#allocation9], %s238
        // Predicated region
        $region33: #{tpu_custom_call.1} parent=27 // pred_check
          %p240 = pneg %p118
        $region34: #{tpu_custom_call.1} parent=27 // pred_check_branch
          %242 = sbr.rel (%p240) target = $region36
        $region35: #{tpu_custom_call.1} parent=27 // pred_region
          %s244 = ssub.s32 32, 32
          %245 = vsyncadd %s236, %s244
          %s246 = smul.addr %s35, 2
          %s247 = smul.addr %s34, 2
          %s248 = sadd.s32 %s246, %s247
          %s249 = smul.addr %s248, 16
          %s250 = scalar_lea.hbm %s5, %s249
          %s252 = sshll.u32 %s239, 4
          %s253 = int_to_ptr.vmem [resolvable:$true] %s252
          %255 = dma.vmem_to_hbm [thread:$0]  %s253, 32, %s250, %s236
        $region36: #{tpu_custom_call.1} parent=27 // pred_fallthru
          _
      $region28: #{tpu_custom_call.1} parent=5 // pred_fallthru
        _
      %p256 = scmp.le.s32.totalorder 2, %s25
      // Predicated region
      $region37: #{tpu_custom_call.1} parent=5 // pred_check
        %p257 = pneg %p256
      $region38: #{tpu_custom_call.1} parent=5 // pred_check_branch
        %259 = sbr.rel (%p257) target = $region40
      $region39: #{tpu_custom_call.1} parent=5 // pred_region
        %s260 = ssub.s32 %s25, 2
        // Predicated region
        $region41: #{tpu_custom_call.1} parent=39 // pred_check
          %p261 = pneg %p124
        $region42: #{tpu_custom_call.1} parent=39 // pred_check_branch
          %263 = sbr.rel (%p261) target = $region44
        $region43: #{tpu_custom_call.1} parent=39 // pred_region
          %s264 = sand.u32 %s109, 1
          %s265 = scalar_lea.sflag [#allocation8], %s264
          %s266 = sand.u32 %s109, 1
          %s267 = smul.addr %s266, 2
          %s268 = scalar_lea.vmem [#allocation9], %s267
          %269 = dma.done %s265, 32
        $region44: #{tpu_custom_call.1} parent=39 // pred_fallthru
          _
      $region40: #{tpu_custom_call.1} parent=5 // pred_fallthru
        _
    $region6: #{tpu_custom_call.1} parent=1 // loop_footer
      %s29 = sadd.s32 1, %s25
    $region7: #{tpu_custom_call.1} parent=1 // loop_footer_branch
      %24 = sbr.rel target = $region3
    $region8: #{tpu_custom_call.1} parent=1 // loop_exit
      _
    %270 = vsyncpa [#allocation7], 1
    %s271 = scalar_lea.sflag [#allocation7], 1
    %272 = vsyncpa %s271, 1
    %273 = vsyncpa [#allocation8], 1
    %s274 = scalar_lea.sflag [#allocation8], 1
    %275 = vsyncpa %s274, 1

</llo_original>
